<compile_context>
chip_gen: v7x
topology: tpu7x:2x2x1
jax: 0.10.0
libtpu: 0.0.40
codegen_flags: <defaults>
</compile_context>

<pallas_src>
import functools
import math

import numpy as np
import jax
import jax.numpy as jnp
from jax.experimental import pallas as pl
from jax.experimental.pallas import tpu as pltpu


def _dc_kernel(x_ref, ks_ref, m_ref, fwf_ref, fhc_ref, fhb_ref, fws_ref, o_ref,
               *, tb, h, w, compute_dtype):
    # x_ref:   (tb*H, W)   channel-0 image rows (real)
    # ks_ref:  (tb*W, 2H)  measured k-space, transposed per image: [Re^T | Im^T]
    # m_ref:   (tb*W, 2H)  sampling mask, transposed and tiled over the re/im halves
    # fwf_ref: (W, 2W)     [F_W.re | F_W.im]                   ('ortho' norm folded in)
    # fhc_ref: (2H, 2H)    [[F_H.re, F_H.im], [-F_H.im, F_H.re]]        (x F_H)
    # fhb_ref: (2H, 2H)    [[F_H.re, -F_H.im], [F_H.im, F_H.re]]        (x conj(F_H))
    # fws_ref: (2W, W)     [[F_W.re], [F_W.im]]                (Re(. conj(F_W)))
    # o_ref:   (tb*H, W)   real part of the data-consistent image
    cd = compute_dtype

    def mm(a, b):
        return jnp.dot(a.astype(cd), b, preferred_element_type=jnp.float32)

    fwf = fwf_ref[...]
    fhc = fhc_ref[...]
    fhb = fhb_ref[...]
    fws = fws_ref[...]

    # (1) forward row transform, whole block in one launch: [Re|Im](X @ F_W)
    r = mm(x_ref[...], fwf)                                        # (tb*H, 2W)

    # (2) per-image transpose (H,W) -> (W,H) of the re/im planes (XLU)
    def t_hw(a):                                                   # (tb*H, W) -> (tb*W, H)
        return jnp.swapaxes(a.reshape(tb, h, w), 1, 2).reshape(tb * w, h)

    rt = jnp.concatenate([t_hw(r[:, :w]), t_hw(r[:, w:])], axis=-1)  # (tb*W, 2H)

    # (3) forward column transform: K^T = (X F_W)^T @ F_H
    kt = mm(rt, fhc)                                               # (tb*W, 2H)

    # (4) data consistency in (transposed) k-space: K <- K + m * (K_meas - K)
    kt = kt + m_ref[...] * (ks_ref[...] - kt)

    # (5) inverse column transform: M^T = K^T @ conj(F_H)
    mt = mm(kt, fhb)                                               # (tb*W, 2H)

    # (6) transpose back to image layout
    def t_wh(a):                                                   # (tb*W, H) -> (tb*H, W)
        return jnp.swapaxes(a.reshape(tb, w, h), 1, 2).reshape(tb * h, w)

    m2 = jnp.concatenate([t_wh(mt[:, :h]), t_wh(mt[:, h:])], axis=-1)  # (tb*H, 2W)

    # (7) inverse row transform, real part only: Mr @ F_W.re + Mi @ F_W.im (fused)
    o_ref[...] = mm(m2, fws).astype(o_ref.dtype)


def _dft_mats(n):
    """Ortho-normalised DFT matrix (real, imag) as float32 numpy constants."""
    k = np.arange(n)
    ang = (-2.0 * math.pi / n) * np.outer(k, k)
    s = 1.0 / math.sqrt(n)                       # fold 'ortho' norm into the matrix
    return (np.cos(ang) * s).astype(np.float32), (np.sin(ang) * s).astype(np.float32)


def _vmem_capacity_bytes():
    """Physical VMEM per TensorCore; conservative fallback = v7x (64 MiB)."""
    try:
        cap = getattr(pltpu.get_tpu_info(), "vmem_capacity_bytes", None)
        if cap:
            return int(cap)
    except Exception:
        pass
    return 64 * 1024 * 1024


def _pick_tb(batch, h, w, const_bytes, vmem_cap):
    """Images per grid step: fill ~40% of VMEM, keep >=2 grid steps, (8,.)-tileable."""
    budget = int(0.42 * vmem_cap)
    # double-buffered block copies (x, ks, mask, out) + in-kernel f32 temporaries
    per_img = 22 * h * w * 4
    avail = max(budget - 2 * const_bytes, per_img)
    tb = int(max(1, min(batch, avail // per_img, 16)))
    if batch >= 2:
        tb = min(tb, batch // 2)     # >=2 grid steps: v7x megacore + DMA/compute overlap

    def ok(t):
        return (batch % t == 0
                and ((t * h) % 8 == 0 or t == batch)
                and ((t * w) % 8 == 0 or t == batch))

    while tb > 1 and not ok(tb):
        tb -= 1
    return tb if ok(tb) else batch


def data_consistency_layer(predicted_img, us_kspace, us_mask,
                           compute_dtype=jnp.float32):
    """predicted_img: (B,C,H,W) f32; us_kspace: (B,H,W,2) f32; us_mask: (B,H,W) f32.
    Returns (B,1,H,W) f32, matching the PyTorch DataConsistencyLayer forward.

    compute_dtype: MXU operand dtype. jnp.float32 (default, ~1e-5 exact) or
    jnp.bfloat16 for the v6e/v7x fast MXU path (f32 accumulation kept;
    re-validate tolerance for large H, W)."""
    B, C, H, W = predicted_img.shape
    assert us_kspace.shape == (B, H, W, 2)
    assert us_mask.shape == (B, H, W)
    cd = jnp.dtype(compute_dtype)

    # --- layout plumbing, once per call (outside the hot loop) ---------------
    # image rows, sublane-batched over the whole batch
    x_s = predicted_img[:, 0, :, :].astype(jnp.float32).reshape(B * H, W)
    # measured k-space / mask presented TRANSPOSED per image so the in-kernel
    # data-consistency blend happens in transposed k-space and every matmul is
    # a lane-dense right multiply.
    ks_t = jnp.transpose(us_kspace.astype(jnp.float32), (0, 2, 3, 1)).reshape(B * W, 2 * H)
    m_t = jnp.transpose(us_mask.astype(jnp.float32), (0, 2, 1))
    m_t = jnp.concatenate([m_t, m_t], axis=-1).reshape(B * W, 2 * H)

    # --- DFT constants ('ortho' norm folded in, complex blocks prebuilt) -----
    fhr, fhi = _dft_mats(H)
    fwr, fwi = _dft_mats(W)
    fwf = jnp.asarray(np.concatenate([fwr, fwi], axis=1), dtype=cd)        # (W, 2W)
    fhc = jnp.asarray(np.block([[fhr, fhi], [-fhi, fhr]]), dtype=cd)       # (2H, 2H)
    fhb = jnp.asarray(np.block([[fhr, -fhi], [fhi, fhr]]), dtype=cd)       # (2H, 2H)
    fws = jnp.asarray(np.concatenate([fwr, fwi], axis=0), dtype=cd)        # (2W, W)

    const_bytes = (4 * W * W + 8 * H * H) * cd.itemsize
    vmem_cap = _vmem_capacity_bytes()
    tb = _pick_tb(B, H, W, const_bytes, vmem_cap)
    grid = (B // tb,)

    kernel = functools.partial(_dc_kernel, tb=tb, h=H, w=W, compute_dtype=cd)

    in_specs = [
        pl.BlockSpec((tb * H, W), lambda g: (g, 0)),          # image rows
        pl.BlockSpec((tb * W, 2 * H), lambda g: (g, 0)),      # k-space (transposed)
        pl.BlockSpec((tb * W, 2 * H), lambda g: (g, 0)),      # mask (transposed, tiled)
        pl.BlockSpec((W, 2 * W), lambda g: (0, 0)),           # [F_W.re | F_W.im]
        pl.BlockSpec((2 * H, 2 * H), lambda g: (0, 0)),       # F_H complex block
        pl.BlockSpec((2 * H, 2 * H), lambda g: (0, 0)),       # conj(F_H) complex block
        pl.BlockSpec((2 * W, W), lambda g: (0, 0)),           # [F_W.re ; F_W.im]
    ]
    out_spec = pl.BlockSpec((tb * H, W), lambda g: (g, 0))

    # Scoped VMEM: raise whenever the per-step working set (incl. in-kernel
    # temporaries) exceeds the smallest per-generation default (16 MiB, v5e);
    # cap at 75% of physical VMEM (48 MiB on v7x, 96 MiB on v5e/v6e).
    vmem_est = 22 * tb * H * W * 4 + 2 * const_bytes
    ckw = dict(dimension_semantics=("parallel",))
    if vmem_est > 12 * 1024 * 1024:
        ckw["vmem_limit_bytes"] = int(min(max(vmem_est * 1.4, 16 * 1024 * 1024),
                                          0.75 * vmem_cap))

    out = pl.pallas_call(
        kernel,
        out_shape=jax.ShapeDtypeStruct((B * H, W), jnp.float32),
        grid_spec=pltpu.PrefetchScalarGridSpec(
            num_scalar_prefetch=0,
            grid=grid,
            in_specs=in_specs,
            out_specs=out_spec),
        compiler_params=pltpu.CompilerParams(**ckw),
    )(x_s, ks_t, m_t, fwf, fhc, fhb, fws)

    return out.reshape(B, 1, H, W)


def _reference(predicted_img, us_kspace, us_mask):
    x = predicted_img[:, 0, :, :]
    k_pred = jnp.fft.fft2(x, norm="ortho")
    ks_c = us_kspace[..., 0] + 1j * us_kspace[..., 1]
    k = us_mask * ks_c + (1.0 - us_mask) * k_pred
    img = jnp.fft.ifft2(k, norm="ortho")
    return jnp.real(img)[:, None, :, :].astype(jnp.float32)


if __name__ == "__main__":
    B, C, H, W = 2, 4, 16, 16
    key = jax.random.PRNGKey(0)
    k1, k2, k3 = jax.random.split(key, 3)

    predicted_img = jax.random.normal(k1, (B, C, H, W), dtype=jnp.float32)
    us_kspace = jax.random.normal(k2, (B, H, W, 2), dtype=jnp.float32)
    us_mask = (jax.random.uniform(k3, (B, H, W)) < 0.5).astype(jnp.float32)

    out = jax.block_until_ready(
        data_consistency_layer(predicted_img, us_kspace, us_mask))
    ref = _reference(predicted_img, us_kspace, us_mask)
    assert out.shape == (B, 1, H, W) and out.dtype == jnp.float32
    assert jnp.allclose(out, ref, atol=1e-4, rtol=1e-4), "f32 path mismatch vs FFT reference"

    # bf16 MXU-operand fast path (v6e/v7x); f32 accumulation, looser tolerance.
    out_bf16 = jax.block_until_ready(
        data_consistency_layer(predicted_img, us_kspace, us_mask,
                               compute_dtype=jnp.bfloat16))
    assert jnp.allclose(out_bf16, ref, atol=2e-1, rtol=2e-1), "bf16 path mismatch"

    print("KERNEL_OK")
</pallas_src>

<mosaic_0001>
module attributes {stable_mosaic.version = 11 : i64} {
  func.func @_dc_kernel(%arg0: i32, %arg1: memref<16x16xf32, #tpu.memory_space<vmem>>, %arg2: memref<16x32xf32, #tpu.memory_space<vmem>>, %arg3: memref<16x32xf32, #tpu.memory_space<vmem>>, %arg4: memref<16x32xf32, #tpu.memory_space<vmem>>, %arg5: memref<32x32xf32, #tpu.memory_space<vmem>>, %arg6: memref<32x32xf32, #tpu.memory_space<vmem>>, %arg7: memref<32x16xf32, #tpu.memory_space<vmem>>, %arg8: memref<16x16xf32, #tpu.memory_space<vmem>>) attributes {dimension_semantics = [#tpu.dimension_semantics<parallel>], iteration_bounds = array<i64: 2>, scalar_prefetch = 0 : i64, scratch_operands = 0 : i64, tpu.core_type = #tpu.core_type<tc>, window_params = [{transform_indices = @transform_0, window_bounds = array<i64: 16, 16>}, {transform_indices = @transform_1, window_bounds = array<i64: 16, 32>}, {transform_indices = @transform_2, window_bounds = array<i64: 16, 32>}, {pipeline_mode = #tpu.pipeline_mode<synchronous>, transform_indices = @transform_3, window_bounds = array<i64: 16, 32>}, {pipeline_mode = #tpu.pipeline_mode<synchronous>, transform_indices = @transform_4, window_bounds = array<i64: 32, 32>}, {pipeline_mode = #tpu.pipeline_mode<synchronous>, transform_indices = @transform_5, window_bounds = array<i64: 32, 32>}, {pipeline_mode = #tpu.pipeline_mode<synchronous>, transform_indices = @transform_6, window_bounds = array<i64: 32, 16>}, {transform_indices = @transform_7, window_bounds = array<i64: 16, 16>}]} {
    %c0 = arith.constant 0 : index
    %c0_0 = arith.constant 0 : index
    %0 = vector.load %arg4[%c0, %c0_0] : memref<16x32xf32, #tpu.memory_space<vmem>>, vector<16x32xf32>
    %c0_1 = arith.constant 0 : index
    %c0_2 = arith.constant 0 : index
    %1 = vector.load %arg5[%c0_1, %c0_2] : memref<32x32xf32, #tpu.memory_space<vmem>>, vector<32x32xf32>
    %c0_3 = arith.constant 0 : index
    %c0_4 = arith.constant 0 : index
    %2 = vector.load %arg6[%c0_3, %c0_4] : memref<32x32xf32, #tpu.memory_space<vmem>>, vector<32x32xf32>
    %c0_5 = arith.constant 0 : index
    %c0_6 = arith.constant 0 : index
    %3 = vector.load %arg7[%c0_5, %c0_6] : memref<32x16xf32, #tpu.memory_space<vmem>>, vector<32x16xf32>
    %c0_7 = arith.constant 0 : index
    %c0_8 = arith.constant 0 : index
    %4 = vector.load %arg1[%c0_7, %c0_8] : memref<16x16xf32, #tpu.memory_space<vmem>>, vector<16x16xf32>
    %cst = arith.constant dense<0.000000e+00> : vector<16x32xf32>
    %5 = tpu.matmul %4, %0, %cst {dimension_numbers = #tpu.dot_dimension_numbers<[1], [0], [0], [1], [0, 0, 1, 1], [], []>} : vector<16x16xf32>, vector<16x32xf32>, vector<16x32xf32> -> vector<16x32xf32>
    %6 = vector.extract_strided_slice %5 {offsets = [0, 0], sizes = [16, 16], strides = [1, 1]} : vector<16x32xf32> to vector<16x16xf32>
    %7 = vector.shape_cast %6 : vector<16x16xf32> to vector<1x16x16xf32>
    %8 = tpu.transpose %7, [0, 2, 1] : vector<1x16x16xf32> -> vector<1x16x16xf32>
    %9 = vector.shape_cast %8 : vector<1x16x16xf32> to vector<16x16xf32>
    %10 = vector.extract_strided_slice %5 {offsets = [0, 16], sizes = [16, 16], strides = [1, 1]} : vector<16x32xf32> to vector<16x16xf32>
    %11 = vector.shape_cast %10 : vector<16x16xf32> to vector<1x16x16xf32>
    %12 = tpu.transpose %11, [0, 2, 1] : vector<1x16x16xf32> -> vector<1x16x16xf32>
    %13 = vector.shape_cast %12 : vector<1x16x16xf32> to vector<16x16xf32>
    %14 = tpu.concatenate %9, %13 in 1 : vector<16x16xf32>, vector<16x16xf32> -> vector<16x32xf32>
    %cst_9 = arith.constant dense<0.000000e+00> : vector<16x32xf32>
    %15 = tpu.matmul %14, %1, %cst_9 {dimension_numbers = #tpu.dot_dimension_numbers<[1], [0], [0], [1], [0, 0, 1, 1], [], []>} : vector<16x32xf32>, vector<32x32xf32>, vector<16x32xf32> -> vector<16x32xf32>
    %c0_10 = arith.constant 0 : index
    %c0_11 = arith.constant 0 : index
    %16 = vector.load %arg3[%c0_10, %c0_11] : memref<16x32xf32, #tpu.memory_space<vmem>>, vector<16x32xf32>
    %c0_12 = arith.constant 0 : index
    %c0_13 = arith.constant 0 : index
    %17 = vector.load %arg2[%c0_12, %c0_13] : memref<16x32xf32, #tpu.memory_space<vmem>>, vector<16x32xf32>
    %18 = arith.subf %17, %15 : vector<16x32xf32>
    %19 = arith.mulf %16, %18 : vector<16x32xf32>
    %20 = arith.addf %15, %19 : vector<16x32xf32>
    %cst_14 = arith.constant dense<0.000000e+00> : vector<16x32xf32>
    %21 = tpu.matmul %20, %2, %cst_14 {dimension_numbers = #tpu.dot_dimension_numbers<[1], [0], [0], [1], [0, 0, 1, 1], [], []>} : vector<16x32xf32>, vector<32x32xf32>, vector<16x32xf32> -> vector<16x32xf32>
    %22 = vector.extract_strided_slice %21 {offsets = [0, 0], sizes = [16, 16], strides = [1, 1]} : vector<16x32xf32> to vector<16x16xf32>
    %23 = vector.shape_cast %22 : vector<16x16xf32> to vector<1x16x16xf32>
    %24 = tpu.transpose %23, [0, 2, 1] : vector<1x16x16xf32> -> vector<1x16x16xf32>
    %25 = vector.shape_cast %24 : vector<1x16x16xf32> to vector<16x16xf32>
    %26 = vector.extract_strided_slice %21 {offsets = [0, 16], sizes = [16, 16], strides = [1, 1]} : vector<16x32xf32> to vector<16x16xf32>
    %27 = vector.shape_cast %26 : vector<16x16xf32> to vector<1x16x16xf32>
    %28 = tpu.transpose %27, [0, 2, 1] : vector<1x16x16xf32> -> vector<1x16x16xf32>
    %29 = vector.shape_cast %28 : vector<1x16x16xf32> to vector<16x16xf32>
    %30 = tpu.concatenate %25, %29 in 1 : vector<16x16xf32>, vector<16x16xf32> -> vector<16x32xf32>
    %cst_15 = arith.constant dense<0.000000e+00> : vector<16x16xf32>
    %31 = tpu.matmul %30, %3, %cst_15 {dimension_numbers = #tpu.dot_dimension_numbers<[1], [0], [0], [1], [0, 0, 1, 1], [], []>} : vector<16x32xf32>, vector<32x16xf32>, vector<16x16xf32> -> vector<16x16xf32>
    %c0_16 = arith.constant 0 : index
    %c0_17 = arith.constant 0 : index
    %32 = vector.load %arg8[%c0_16, %c0_17] : memref<16x16xf32, #tpu.memory_space<vmem>>, vector<16x16xf32>
    tpu.vector_store %arg8[%c0_16, %c0_17], %31 {strides = array<i32>} : memref<16x16xf32, #tpu.memory_space<vmem>>, vector<16x16xf32>,
    return
  }
  func.func @transform_0(%arg0: i32) -> (i32, i32) {
    %c0_i32 = arith.constant 0 : i32
    %c0_i32_0 = arith.constant 0 : i32
    return %arg0, %c0_i32 : i32, i32
  }
  func.func @transform_1(%arg0: i32) -> (i32, i32) {
    %c0_i32 = arith.constant 0 : i32
    %c0_i32_0 = arith.constant 0 : i32
    return %arg0, %c0_i32 : i32, i32
  }
  func.func @transform_2(%arg0: i32) -> (i32, i32) {
    %c0_i32 = arith.constant 0 : i32
    %c0_i32_0 = arith.constant 0 : i32
    return %arg0, %c0_i32 : i32, i32
  }
  func.func @transform_3(%arg0: i32) -> (i32, i32) {
    %c0_i32 = arith.constant 0 : i32
    %c0_i32_0 = arith.constant 0 : i32
    %c0_i32_1 = arith.constant 0 : i32
    return %c0_i32, %c0_i32_0 : i32, i32
  }
  func.func @transform_4(%arg0: i32) -> (i32, i32) {
    %c0_i32 = arith.constant 0 : i32
    %c0_i32_0 = arith.constant 0 : i32
    %c0_i32_1 = arith.constant 0 : i32
    return %c0_i32, %c0_i32_0 : i32, i32
  }
  func.func @transform_5(%arg0: i32) -> (i32, i32) {
    %c0_i32 = arith.constant 0 : i32
    %c0_i32_0 = arith.constant 0 : i32
    %c0_i32_1 = arith.constant 0 : i32
    return %c0_i32, %c0_i32_0 : i32, i32
  }
  func.func @transform_6(%arg0: i32) -> (i32, i32) {
    %c0_i32 = arith.constant 0 : i32
    %c0_i32_0 = arith.constant 0 : i32
    %c0_i32_1 = arith.constant 0 : i32
    return %c0_i32, %c0_i32_0 : i32, i32
  }
  func.func @transform_7(%arg0: i32) -> (i32, i32) {
    %c0_i32 = arith.constant 0 : i32
    %c0_i32_0 = arith.constant 0 : i32
    return %arg0, %c0_i32 : i32, i32
  }
}

</mosaic_0001>

<llo_original>
// kernel: tpu_custom_call.1
$region0: #{tpu_custom_call.1}
  #allocation0 [shape = 'u32[]', space=smem, size = 0x4, offset = 0x4, fixed_abs, tag = 'smem constant byte address 0x4 - core index']
  #allocation1 [shape = 'u32[144,128]{1,0:T(1,128)}', space=vmem, size = 0x12000, scoped, tag = 'internal scratch']
  %s0 = inlined_call_operand.vmem [shape: f32[32,16], index: 0, kind: input, shape index: {}]
  %s1 = inlined_call_operand.vmem [shape: f32[32,32], index: 1, kind: input, shape index: {}]
  %s2 = inlined_call_operand.vmem [shape: f32[32,32], index: 2, kind: input, shape index: {}]
  %s3 = inlined_call_operand.hbm [shape: f32[16,32], index: 3, kind: input, shape index: {}]
  %s4 = inlined_call_operand.vmem [shape: f32[32,32], index: 4, kind: input, shape index: {}]
  %s5 = inlined_call_operand.hbm [shape: f32[32,32], index: 5, kind: input, shape index: {}]
  %s6 = inlined_call_operand.vmem [shape: f32[32,16], index: 6, kind: input, shape index: {}]
  %s7 = inlined_call_operand.vmem [shape: f32[32,16], index: 7, kind: output, shape index: {}]
  %s8 = sld [smem:[#allocation0]]
  $region69: #{tpu_custom_call.1} parent=0
    _
  %s10 = ssub.s32 1, %s8
  %s11 = scalar_select 0, %s10, %s8
  $region1: #{tpu_custom_call.1} parent=0
    #allocation2 [shape = 'u8[8192]{0}', space=vmem, size = 0x2000, scoped, tag = 'input window, operand 3, single buffered']
    #allocation3 [shape = 's32[2]{0}', space=sflag, size = 0x8, scoped, tag = 'scoped memory for tpu_custom_call.1']
    #allocation4 [shape = 'u8[16384]{0}', space=vmem, size = 0x4000, scoped, tag = 'input window, operand 5, single buffered']
    #allocation5 [shape = 's32[1]{0}', space=sflag, size = 0x4, scoped, tag = 'scoped memory for tpu_custom_call.1']
    %12 = vsyncpa [#allocation3], 0
    %13 = vsyncpa [#allocation5], 0
    loop: start=0, step=1, limit=4
    $region2: #{tpu_custom_call.1} parent=1 // loop_pre_header
      _
    $region3: #{tpu_custom_call.1} parent=1 // loop_header
      %s15 = sphi 0, %s19
      %p16 = scmp.ge.s32.totalorder %s15, 4
      %s25 = sphi 0, %s27
      %s28 = sphi 0, %s25
      %s29 = sphi 0, %s28
      %s45 = sphi 0, %s29
      %s51 = sphi 0, %s53
      %s54 = sphi 0, %s51
      %s55 = sphi 0, %s54
      %s71 = sphi 0, %s55
      %s77 = sphi 0, %s79
      %s80 = sphi 0, %s77
      %s81 = sphi 0, %s80
      %s97 = sphi 0, %s81
      %s101 = sphi 0, %s101
      %s103 = sphi 0, %s101
      %s104 = sphi 0, %s103
      %s118 = sphi 0, %s104
      %s122 = sphi 0, %s122
      %s124 = sphi 0, %s122
      %s125 = sphi 0, %s124
      %s139 = sphi 0, %s125
      %s143 = sphi 0, %s143
      %s145 = sphi 0, %s143
      %s146 = sphi 0, %s145
      %s160 = sphi 0, %s146
      %s164 = sphi 0, %s164
      %s166 = sphi 0, %s164
      %s167 = sphi 0, %s166
      %s181 = sphi 0, %s167
      %s187 = sphi 0, %s189
      %s190 = sphi 0, %s187
      %s191 = sphi 0, %s190
      %s207 = sphi 0, %s191
    $region4: #{tpu_custom_call.1} parent=1 // loop_header_branch
      %18 = sbr.rel (%p16) target = $region8
    $region5: #{tpu_custom_call.1} parent=1 // loop_body
      %s20 = ssub.s32 %s15, 1
      %s21 = ssub.s32 %s15, 2
      %s22 = sadd.s32 %s15, 1
      %s23 = ssub.s32 %s15, %s22
      %p24 = scmp.eq.s32.totalorder %s23, 0
      %s26 = sadd.s32 %s25, 1
      %s27 = scalar_select %p24, %s25, %s26
      %p30 = pneg %p24
      %p31 = scmp.eq.s32.totalorder %s15, 1
      %p32 = por %p30, %p31
      %p33 = scmp.ne.s32.totalorder %s25, %s28
      %p34 = scmp.eq.s32.totalorder %s15, 0
      %p35 = por %p33, %p34
      %p36 = scmp.ne.s32.totalorder %s25, %s28
      %p37 = scmp.eq.s32.totalorder %s20, 1
      %p38 = por %p36, %p37
      %p39 = scmp.ne.s32.totalorder %s28, %s29
      %p40 = scmp.eq.s32.totalorder %s20, 0
      %p41 = por %p39, %p40
      %p42 = scmp.ne.s32.totalorder %s28, %s29
      %p43 = scmp.eq.s32.totalorder %s21, 1
      %p44 = por %p42, %p43
      %p46 = scmp.ne.s32.totalorder %s29, %s45
      %p47 = scmp.eq.s32.totalorder %s21, 0
      %p48 = por %p46, %p47
      %s49 = ssub.s32 %s15, %s22
      %p50 = scmp.eq.s32.totalorder %s49, 0
      %s52 = sadd.s32 %s51, 1
      %s53 = scalar_select %p50, %s51, %s52
      %p56 = pneg %p50
      %p57 = scmp.eq.s32.totalorder %s15, 1
      %p58 = por %p56, %p57
      %p59 = scmp.ne.s32.totalorder %s51, %s54
      %p60 = scmp.eq.s32.totalorder %s15, 0
      %p61 = por %p59, %p60
      %p62 = scmp.ne.s32.totalorder %s51, %s54
      %p63 = scmp.eq.s32.totalorder %s20, 1
      %p64 = por %p62, %p63
      %p65 = scmp.ne.s32.totalorder %s54, %s55
      %p66 = scmp.eq.s32.totalorder %s20, 0
      %p67 = por %p65, %p66
      %p68 = scmp.ne.s32.totalorder %s54, %s55
      %p69 = scmp.eq.s32.totalorder %s21, 1
      %p70 = por %p68, %p69
      %p72 = scmp.ne.s32.totalorder %s55, %s71
      %p73 = scmp.eq.s32.totalorder %s21, 0
      %p74 = por %p72, %p73
      %s75 = ssub.s32 %s15, %s22
      %p76 = scmp.eq.s32.totalorder %s75, 0
      %s78 = sadd.s32 %s77, 1
      %s79 = scalar_select %p76, %s77, %s78
      %p82 = pneg %p76
      %p83 = scmp.eq.s32.totalorder %s15, 1
      %p84 = por %p82, %p83
      %p85 = scmp.ne.s32.totalorder %s77, %s80
      %p86 = scmp.eq.s32.totalorder %s15, 0
      %p87 = por %p85, %p86
      %p88 = scmp.ne.s32.totalorder %s77, %s80
      %p89 = scmp.eq.s32.totalorder %s20, 1
      %p90 = por %p88, %p89
      %p91 = scmp.ne.s32.totalorder %s80, %s81
      %p92 = scmp.eq.s32.totalorder %s20, 0
      %p93 = por %p91, %p92
      %p94 = scmp.ne.s32.totalorder %s80, %s81
      %p95 = scmp.eq.s32.totalorder %s21, 1
      %p96 = por %p94, %p95
      %p98 = scmp.ne.s32.totalorder %s81, %s97
      %p99 = scmp.eq.s32.totalorder %s21, 0
      %p100 = por %p98, %p99
      %s102 = sadd.s32 %s101, 1
      %p105 = scmp.eq.s32.totalorder %s15, 1
      %p106 = scmp.ne.s32.totalorder %s101, %s103
      %p107 = scmp.eq.s32.totalorder %s15, 0
      %p108 = por %p106, %p107
      %p109 = scmp.ne.s32.totalorder %s101, %s103
      %p110 = scmp.eq.s32.totalorder %s20, 1
      %p111 = por %p109, %p110
      %p112 = scmp.ne.s32.totalorder %s103, %s104
      %p113 = scmp.eq.s32.totalorder %s20, 0
      %p114 = por %p112, %p113
      %p115 = scmp.ne.s32.totalorder %s103, %s104
      %p116 = scmp.eq.s32.totalorder %s21, 1
      %p117 = por %p115, %p116
      %p119 = scmp.ne.s32.totalorder %s104, %s118
      %p120 = scmp.eq.s32.totalorder %s21, 0
      %p121 = por %p119, %p120
      %s123 = sadd.s32 %s122, 1
      %p126 = scmp.eq.s32.totalorder %s15, 1
      %p127 = scmp.ne.s32.totalorder %s122, %s124
      %p128 = scmp.eq.s32.totalorder %s15, 0
      %p129 = por %p127, %p128
      %p130 = scmp.ne.s32.totalorder %s122, %s124
      %p131 = scmp.eq.s32.totalorder %s20, 1
      %p132 = por %p130, %p131
      %p133 = scmp.ne.s32.totalorder %s124, %s125
      %p134 = scmp.eq.s32.totalorder %s20, 0
      %p135 = por %p133, %p134
      %p136 = scmp.ne.s32.totalorder %s124, %s125
      %p137 = scmp.eq.s32.totalorder %s21, 1
      %p138 = por %p136, %p137
      %p140 = scmp.ne.s32.totalorder %s125, %s139
      %p141 = scmp.eq.s32.totalorder %s21, 0
      %p142 = por %p140, %p141
      %s144 = sadd.s32 %s143, 1
      %p147 = scmp.eq.s32.totalorder %s15, 1
      %p148 = scmp.ne.s32.totalorder %s143, %s145
      %p149 = scmp.eq.s32.totalorder %s15, 0
      %p150 = por %p148, %p149
      %p151 = scmp.ne.s32.totalorder %s143, %s145
      %p152 = scmp.eq.s32.totalorder %s20, 1
      %p153 = por %p151, %p152
      %p154 = scmp.ne.s32.totalorder %s145, %s146
      %p155 = scmp.eq.s32.totalorder %s20, 0
      %p156 = por %p154, %p155
      %p157 = scmp.ne.s32.totalorder %s145, %s146
      %p158 = scmp.eq.s32.totalorder %s21, 1
      %p159 = por %p157, %p158
      %p161 = scmp.ne.s32.totalorder %s146, %s160
      %p162 = scmp.eq.s32.totalorder %s21, 0
      %p163 = por %p161, %p162
      %s165 = sadd.s32 %s164, 1
      %p168 = scmp.eq.s32.totalorder %s15, 1
      %p169 = scmp.ne.s32.totalorder %s164, %s166
      %p170 = scmp.eq.s32.totalorder %s15, 0
      %p171 = por %p169, %p170
      %p172 = scmp.ne.s32.totalorder %s164, %s166
      %p173 = scmp.eq.s32.totalorder %s20, 1
      %p174 = por %p172, %p173
      %p175 = scmp.ne.s32.totalorder %s166, %s167
      %p176 = scmp.eq.s32.totalorder %s20, 0
      %p177 = por %p175, %p176
      %p178 = scmp.ne.s32.totalorder %s166, %s167
      %p179 = scmp.eq.s32.totalorder %s21, 1
      %p180 = por %p178, %p179
      %p182 = scmp.ne.s32.totalorder %s167, %s181
      %p183 = scmp.eq.s32.totalorder %s21, 0
      %p184 = por %p182, %p183
      %s185 = ssub.s32 %s15, %s22
      %p186 = scmp.eq.s32.totalorder %s185, 0
      %s188 = sadd.s32 %s187, 1
      %s189 = scalar_select %p186, %s187, %s188
      %p192 = pneg %p186
      %p193 = scmp.eq.s32.totalorder %s15, 1
      %p194 = por %p192, %p193
      %p195 = scmp.ne.s32.totalorder %s187, %s190
      %p196 = scmp.eq.s32.totalorder %s15, 0
      %p197 = por %p195, %p196
      %p198 = scmp.ne.s32.totalorder %s187, %s190
      %p199 = scmp.eq.s32.totalorder %s20, 1
      %p200 = por %p198, %p199
      %p201 = scmp.ne.s32.totalorder %s190, %s191
      %p202 = scmp.eq.s32.totalorder %s20, 0
      %p203 = por %p201, %p202
      %p204 = scmp.ne.s32.totalorder %s190, %s191
      %p205 = scmp.eq.s32.totalorder %s21, 1
      %p206 = por %p204, %p205
      %p208 = scmp.ne.s32.totalorder %s191, %s207
      %p209 = scmp.eq.s32.totalorder %s21, 0
      %p210 = por %p208, %p209
      %p211 = scmp.le.s32.totalorder 1, %s15
      %p212 = scmp.lt.s32.totalorder %s15, 3
      %p213 = pnand %p211, %p212
      %p214 = pneg %p213
      // Predicated region
      $region9: #{tpu_custom_call.1} parent=5 // pred_check
        _
      $region10: #{tpu_custom_call.1} parent=5 // pred_check_branch
        %216 = sbr.rel (%p213) target = $region12
      $region11: #{tpu_custom_call.1} parent=5 // pred_region
        %s217 = ssub.s32 %s15, 1
        // Predicated region
        $region13: #{tpu_custom_call.1} parent=11 // pred_check
          %p218 = pneg %p114
        $region14: #{tpu_custom_call.1} parent=11 // pred_check_branch
          %220 = sbr.rel (%p218) target = $region16
        $region15: #{tpu_custom_call.1} parent=11 // pred_region
          %s222 = ssub.s32 256, 256
          %223 = vsyncadd [#allocation3], %s222
          %s224 = sshll.u32 [#allocation2], 4
          %s225 = int_to_ptr.vmem [resolvable:$true] %s224
          %230 = dma.hbm_to_vmem [thread:$0]  %s3, 256, %s225, [#allocation3], 128, 128, 8
        $region16: #{tpu_custom_call.1} parent=11 // pred_fallthru
          _
        // Predicated region
        $region17: #{tpu_custom_call.1} parent=11 // pred_check
          %p231 = pneg %p135
        $region18: #{tpu_custom_call.1} parent=11 // pred_check_branch
          %233 = sbr.rel (%p231) target = $region20
        $region19: #{tpu_custom_call.1} parent=11 // pred_region
          _
        $region20: #{tpu_custom_call.1} parent=11 // pred_fallthru
          _
        // Predicated region
        $region21: #{tpu_custom_call.1} parent=11 // pred_check
          %p234 = pneg %p156
        $region22: #{tpu_custom_call.1} parent=11 // pred_check_branch
          %236 = sbr.rel (%p234) target = $region24
        $region23: #{tpu_custom_call.1} parent=11 // pred_region
          %s238 = ssub.s32 512, 512
          %239 = vsyncadd [#allocation5], %s238
          %s240 = sshll.u32 [#allocation4], 4
          %s241 = int_to_ptr.vmem [resolvable:$true] %s240
          %246 = dma.hbm_to_vmem [thread:$0]  %s5, 512, %s241, [#allocation5], 128, 128, 8
        $region24: #{tpu_custom_call.1} parent=11 // pred_fallthru
          _
        // Predicated region
        $region25: #{tpu_custom_call.1} parent=11 // pred_check
          %p247 = pneg %p177
        $region26: #{tpu_custom_call.1} parent=11 // pred_check_branch
          %249 = sbr.rel (%p247) target = $region28
        $region27: #{tpu_custom_call.1} parent=11 // pred_region
          _
        $region28: #{tpu_custom_call.1} parent=11 // pred_fallthru
          _
      $region12: #{tpu_custom_call.1} parent=5 // pred_fallthru
        _
      %p250 = scmp.lt.s32.totalorder %s15, 2
      // Predicated region
      $region29: #{tpu_custom_call.1} parent=5 // pred_check
        %p251 = pneg %p250
      $region30: #{tpu_custom_call.1} parent=5 // pred_check_branch
        %253 = sbr.rel (%p251) target = $region32
      $region31: #{tpu_custom_call.1} parent=5 // pred_region
        // Predicated region
        $region33: #{tpu_custom_call.1} parent=31 // pred_check
          %p254 = pneg %p35
        $region34: #{tpu_custom_call.1} parent=31 // pred_check_branch
          %256 = sbr.rel (%p254) target = $region36
        $region35: #{tpu_custom_call.1} parent=31 // pred_region
          %s257 = smul.u32 2, %s15
          %p258 = scmp.lt.s32.totalorder %s257, 3
          %s259 = scalar_select %p258, %s257, 3
          %s260 = smul.addr %s259, 8
          %s261 = scalar_lea.vmem %s0, %s260
          %s262 = smul.u32 2, %s15
        $region36: #{tpu_custom_call.1} parent=31 // pred_fallthru
          _
        // Predicated region
        $region37: #{tpu_custom_call.1} parent=31 // pred_check
          %p263 = pneg %p61
        $region38: #{tpu_custom_call.1} parent=31 // pred_check_branch
          %265 = sbr.rel (%p263) target = $region40
        $region39: #{tpu_custom_call.1} parent=31 // pred_region
          %s266 = smul.u32 2, %s15
          %p267 = scmp.lt.s32.totalorder %s266, 3
          %s268 = scalar_select %p267, %s266, 3
          %s269 = smul.addr %s268, 8
          %s270 = scalar_lea.vmem %s1, %s269
          %s271 = smul.u32 2, %s15
        $region40: #{tpu_custom_call.1} parent=31 // pred_fallthru
          _
        // Predicated region
        $region41: #{tpu_custom_call.1} parent=31 // pred_check
          %p272 = pneg %p87
        $region42: #{tpu_custom_call.1} parent=31 // pred_check_branch
          %274 = sbr.rel (%p272) target = $region44
        $region43: #{tpu_custom_call.1} parent=31 // pred_region
          %s275 = smul.u32 2, %s15
          %p276 = scmp.lt.s32.totalorder %s275, 3
          %s277 = scalar_select %p276, %s275, 3
          %s278 = smul.addr %s277, 8
          %s279 = scalar_lea.vmem %s2, %s278
          %s280 = smul.u32 2, %s15
        $region44: #{tpu_custom_call.1} parent=31 // pred_fallthru
          _
      $region32: #{tpu_custom_call.1} parent=5 // pred_fallthru
        _
      %p281 = scmp.le.s32.totalorder 1, %s15
      %p282 = scmp.lt.s32.totalorder %s15, 3
      %p283 = pnand %p281, %p282
      %p284 = pneg %p283
      // Predicated region
      $region45: #{tpu_custom_call.1} parent=5 // pred_check
        _
      $region46: #{tpu_custom_call.1} parent=5 // pred_check_branch
        %286 = sbr.rel (%p283) target = $region48
      $region47: #{tpu_custom_call.1} parent=5 // pred_region
        %s287 = ssub.s32 %s15, 1
        // Predicated region
        $region49: #{tpu_custom_call.1} parent=47 // pred_check
          %p288 = pneg %p114
        $region50: #{tpu_custom_call.1} parent=47 // pred_check_branch
          %290 = sbr.rel (%p288) target = $region52
        $region51: #{tpu_custom_call.1} parent=47 // pred_region
          %291 = dma.done [#allocation3], 256
        $region52: #{tpu_custom_call.1} parent=47 // pred_fallthru
          _
        // Predicated region
        $region53: #{tpu_custom_call.1} parent=47 // pred_check
          %p292 = pneg %p156
        $region54: #{tpu_custom_call.1} parent=47 // pred_check_branch
          %294 = sbr.rel (%p292) target = $region56
        $region55: #{tpu_custom_call.1} parent=47 // pred_region
          %295 = dma.done [#allocation5], 512
        $region56: #{tpu_custom_call.1} parent=47 // pred_fallthru
          _
        %s296 = smul.u32 2, %s20
        %p297 = scmp.lt.s32.totalorder %s296, 3
        %s298 = scalar_select %p297, %s296, 3
        %s299 = smul.addr %s298, 8
        %s300 = scalar_lea.vmem %s0, %s299
        %p301 = pneg %p41
        %p302 = pneg %p38
        %s303 = smul.u32 2, %s20
        %p304 = scmp.lt.s32.totalorder %s303, 3
        %s305 = scalar_select %p304, %s303, 3
        %s306 = smul.addr %s305, 8
        %s307 = scalar_lea.vmem %s1, %s306
        %p308 = pneg %p67
        %p309 = pneg %p64
        %s310 = smul.u32 2, %s20
        %p311 = scmp.lt.s32.totalorder %s310, 3
        %s312 = scalar_select %p311, %s310, 3
        %s313 = smul.addr %s312, 8
        %s314 = scalar_lea.vmem %s2, %s313
        %p315 = pneg %p93
        %p316 = pneg %p90
        %p317 = pneg %p114
        %p318 = pneg %p111
        %p319 = pneg %p135
        %p320 = pneg %p132
        %p321 = pneg %p156
        %p322 = pneg %p153
        %p323 = pneg %p177
        %p324 = pneg %p174
        %p325 = pneg %p203
        %p326 = pneg %p200
        %s327 = smul.u32 2, %s20
        %p328 = scmp.lt.s32.totalorder %s327, 3
        %s329 = scalar_select %p328, %s327, 3
        %s330 = smul.addr %s329, 8
        %s331 = scalar_lea.vmem %s7, %s330
        %s332 = smul.u32 2, %s20
        %p333 = scmp.lt.s32.totalorder %s332, 3
        %s334 = scalar_select %p333, %s332, 3
        %s335 = smul.addr %s334, 8
        %s336 = scalar_lea.vmem %s0, %s335
        %s337 = smul.u32 2, %s20
        %s338 = smul.u32 2, %s20
        %p339 = scmp.lt.s32.totalorder %s338, 3
        %s340 = scalar_select %p339, %s338, 3
        %s341 = smul.addr %s340, 8
        %s342 = scalar_lea.vmem %s1, %s341
        %s343 = smul.u32 2, %s20
        %s344 = smul.u32 2, %s20
        %p345 = scmp.lt.s32.totalorder %s344, 3
        %s346 = scalar_select %p345, %s344, 3
        %s347 = smul.addr %s346, 8
        %s348 = scalar_lea.vmem %s2, %s347
        %s349 = smul.u32 2, %s20
        %s350 = smul.u32 2, %s20
        %p351 = scmp.lt.s32.totalorder %s350, 3
        %s352 = scalar_select %p351, %s350, 3
        %s353 = smul.addr %s352, 8
        %s354 = scalar_lea.vmem %s7, %s353
        %s355 = smul.u32 2, %s20
        %v356 = vld [vmem:[#allocation2] sm:$0xff]
        %v357 = vld [vmem:[#allocation2 + $0x8] sm:$0xff]
        %v358 = vld [vmem:[%s4] sm:$0xff]
        %v359 = vld [vmem:[%s4 + $0x8] sm:$0xff]
        %v360 = vld [vmem:[%s4 + $0x10] sm:$0xff]
        %v361 = vld [vmem:[%s4 + $0x18] sm:$0xff]
        %v362 = vld [vmem:[#allocation4] sm:$0xff]
        %v363 = vld [vmem:[#allocation4 + $0x8] sm:$0xff]
        %v364 = vld [vmem:[#allocation4 + $0x10] sm:$0xff]
        %v365 = vld [vmem:[#allocation4 + $0x18] sm:$0xff]
        %v366 = vld [vmem:[%s6] sm:$0xff]
        %v367 = vld [vmem:[%s6 + $0x8] sm:$0xff]
        %v368 = vld [vmem:[%s6 + $0x10] sm:$0xff]
        %v369 = vld [vmem:[%s6 + $0x18] sm:$0xff]
        %v370 = vld [vmem:[%s336] sm:$0xff]
        %v371 = vld [vmem:[%s336 + $0x8] sm:$0xff]
        %vm372 = vcmask 130048
        %v374 = vsel %vm372, %v370, 0
        %v377 = vsel %vm372, %v371, 0
        %379 = vmatprep.subr.mxu0 0.0
        %380 = vmatpush1.msra.mxu0 %v356
        %381 = vmatprep.subr.mxu0 0.0
        %382 = vmatpush1.msra.mxu0 %v357
        %383 = vmatprep.subr.mxu0 0.0
        %384 = vmatpush1.msra.mxu0 0.0
        %385 = vmatprep.subr.mxu0 0.0
        %386 = vmatpush1.msra.mxu0 0.0
        %387 = vmatprep.subr.mxu0 0.0
        %388 = vmatpush1.msra.mxu0 0.0
        %389 = vmatprep.subr.mxu0 0.0
        %390 = vmatpush1.msra.mxu0 0.0
        %391 = vmatprep.subr.mxu0 0.0
        %392 = vmatpush1.msra.mxu0 0.0
        %393 = vmatprep.subr.mxu0 0.0
        %394 = vmatpush1.msra.mxu0 0.0
        %395 = vmatprep.subr.mxu0 0.0
        %396 = vmatpush1.msra.mxu0 0.0
        %397 = vmatprep.subr.mxu0 0.0
        %398 = vmatpush1.msra.mxu0 0.0
        %399 = vmatprep.subr.mxu0 0.0
        %400 = vmatpush1.msra.mxu0 0.0
        %401 = vmatprep.subr.mxu0 0.0
        %402 = vmatpush1.msra.mxu0 0.0
        %403 = vmatprep.subr.mxu0 0.0
        %404 = vmatpush1.msra.mxu0 0.0
        %405 = vmatprep.subr.mxu0 0.0
        %406 = vmatpush1.msra.mxu0 0.0
        %407 = vmatprep.subr.mxu0 0.0
        %408 = vmatpush1.msra.mxu0 0.0
        %409 = vmatprep.subr.mxu0 0.0
        %410 = vmatpush1.msra.mxu0 0.0
        %411 = vmatprep.subr.mxu0 0.0
        %412 = vmatpush1.msra.mxu0 0.0
        %413 = vmatprep.subr.mxu0 0.0
        %414 = vmatpush1.msra.mxu0 0.0
        %415 = vmatprep.subr.mxu0 0.0
        %416 = vmatpush1.msra.mxu0 0.0
        %417 = vmatprep.subr.mxu0 0.0
        %418 = vmatpush1.msra.mxu0 0.0
        %419 = vmatprep.subr.mxu0 0.0
        %420 = vmatpush1.msra.mxu0 0.0
        %421 = vmatprep.subr.mxu0 0.0
        %422 = vmatpush1.msra.mxu0 0.0
        %423 = vmatprep.subr.mxu0 0.0
        %424 = vmatpush1.msra.mxu0 0.0
        %425 = vmatprep.subr.mxu0 0.0
        %426 = vmatpush1.msra.mxu0 0.0
        %427 = vmatprep.subr.mxu0 0.0
        %428 = vmatpush1.msra.mxu0 0.0
        %429 = vmatprep.subr.mxu0 0.0
        %430 = vmatpush1.msra.mxu0 0.0
        %431 = vmatprep.subr.mxu0 0.0
        %432 = vmatpush1.msra.mxu0 0.0
        %433 = vmatprep.subr.mxu0 0.0
        %434 = vmatpush1.msra.mxu0 0.0
        %435 = vmatprep.subr.mxu0 0.0
        %436 = vmatpush1.msra.mxu0 0.0
        %437 = vmatprep.subr.mxu0 0.0
        %438 = vmatpush1.msra.mxu0 0.0
        %439 = vmatprep.subr.mxu0 0.0
        %440 = vmatpush1.msra.mxu0 0.0
        %441 = vmatprep.subr.mxu0 0.0
        %442 = vmatpush1.msra.mxu0 0.0
        %443 = vmatprep.mubr.f32.mxu0 0.0
        %444 = vmatmul.mubr.f32.gmra.mrb[0].mxu0 %v374
        %v445 = vpop.f32.mrb[0].mxu0
        %v446 = vadd.f32 0.0, %v445
        %v447 = vpop.f32.mrb[0].mxu0
        %448 = vmatprep.mubr.f32.mxu0 0.0
        %449 = vmatmul.mubr.f32.gmra.mrb[0].mxu0 %v377
        %v450 = vpop.f32.mrb[0].mxu0
        %v451 = vadd.f32 0.0, %v450
        %v452 = vpop.f32.mrb[0].mxu0
        %453 = vdwg.mxu0
        %454 = vxpose.xlu0.b32.start [1/16] %v446, 128
        %455 = vxpose.xlu0.b32.cont [2/16] %v451, 128
        %456 = vxpose.xlu0.b32.cont [3/16] 0.0, 128
        %457 = vxpose.xlu0.b32.cont [4/16] 0.0, 128
        %458 = vxpose.xlu0.b32.cont [5/16] 0.0, 128
        %459 = vxpose.xlu0.b32.cont [6/16] 0.0, 128
        %460 = vxpose.xlu0.b32.cont [7/16] 0.0, 128
        %461 = vxpose.xlu0.b32.cont [8/16] 0.0, 128
        %462 = vxpose.xlu0.b32.cont [9/16] 0.0, 128
        %463 = vxpose.xlu0.b32.cont [10/16] 0.0, 128
        %464 = vxpose.xlu0.b32.cont [11/16] 0.0, 128
        %465 = vxpose.xlu0.b32.cont [12/16] 0.0, 128
        %466 = vxpose.xlu0.b32.cont [13/16] 0.0, 128
        %467 = vxpose.xlu0.b32.cont [14/16] 0.0, 128
        %468 = vxpose.xlu0.b32.cont [15/16] 0.0, 128
        %469 = vxpose.xlu0.b32.end [16/16] 0.0, 128
        %v470 = vpop.trf.xlu0
        %v471 = vpop.trf.xlu0
        %v472 = vpop.trf.xlu0
        %v473 = vpop.trf.xlu0
        %v474 = vpop.trf.xlu0
        %v475 = vpop.trf.xlu0
        %v476 = vpop.trf.xlu0
        %v477 = vpop.trf.xlu0
        %v478 = vpop.trf.xlu0
        %v479 = vpop.trf.xlu0
        %v480 = vpop.trf.xlu0
        %v481 = vpop.trf.xlu0
        %v482 = vpop.trf.xlu0
        %v483 = vpop.trf.xlu0
        %v484 = vpop.trf.xlu0
        %v485 = vpop.trf.xlu0
        %488 = vrot.lane.b32.xlu0 %v446, 112
        %v489 = vpop.permute.xlu0 %488
        %490 = vrot.lane.b32.xlu0 %v451, 112
        %v491 = vpop.permute.xlu0 %490
        %494 = vxpose.xlu0.b32.start [1/16] %v489, 128
        %495 = vxpose.xlu0.b32.cont [2/16] %v491, 128
        %496 = vxpose.xlu0.b32.cont [3/16] 0.0, 128
        %497 = vxpose.xlu0.b32.cont [4/16] 0.0, 128
        %498 = vxpose.xlu0.b32.cont [5/16] 0.0, 128
        %499 = vxpose.xlu0.b32.cont [6/16] 0.0, 128
        %500 = vxpose.xlu0.b32.cont [7/16] 0.0, 128
        %501 = vxpose.xlu0.b32.cont [8/16] 0.0, 128
        %502 = vxpose.xlu0.b32.cont [9/16] 0.0, 128
        %503 = vxpose.xlu0.b32.cont [10/16] 0.0, 128
        %504 = vxpose.xlu0.b32.cont [11/16] 0.0, 128
        %505 = vxpose.xlu0.b32.cont [12/16] 0.0, 128
        %506 = vxpose.xlu0.b32.cont [13/16] 0.0, 128
        %507 = vxpose.xlu0.b32.cont [14/16] 0.0, 128
        %508 = vxpose.xlu0.b32.cont [15/16] 0.0, 128
        %509 = vxpose.xlu0.b32.end [16/16] 0.0, 128
        %v510 = vpop.trf.xlu0
        %v511 = vpop.trf.xlu0
        %v512 = vpop.trf.xlu0
        %v513 = vpop.trf.xlu0
        %v514 = vpop.trf.xlu0
        %v515 = vpop.trf.xlu0
        %v516 = vpop.trf.xlu0
        %v517 = vpop.trf.xlu0
        %v518 = vpop.trf.xlu0
        %v519 = vpop.trf.xlu0
        %v520 = vpop.trf.xlu0
        %v521 = vpop.trf.xlu0
        %v522 = vpop.trf.xlu0
        %v523 = vpop.trf.xlu0
        %v524 = vpop.trf.xlu0
        %v525 = vpop.trf.xlu0
        %528 = vrot.lane.b32.xlu0 %v510, 16
        %v529 = vpop.permute.xlu0 %528
        %530 = vrot.lane.b32.xlu0 %v511, 16
        %v531 = vpop.permute.xlu0 %530
        %v534 = vsel %vm372, %v470, %v529
        %v535 = vsel %vm372, %v471, %v531
        %vm536 = vcmask 261120
        %v538 = vsel %vm536, %v534, 0
        %v541 = vsel %vm536, %v535, 0
        %543 = vmatprep.subr.mxu0 0.0
        %544 = vmatpush1.msra.mxu0 %v358
        %545 = vmatprep.subr.mxu0 0.0
        %546 = vmatpush1.msra.mxu0 %v359
        %547 = vmatprep.subr.mxu0 0.0
        %548 = vmatpush1.msra.mxu0 %v360
        %549 = vmatprep.subr.mxu0 0.0
        %550 = vmatpush1.msra.mxu0 %v361
        %551 = vmatprep.subr.mxu0 0.0
        %552 = vmatpush1.msra.mxu0 0.0
        %553 = vmatprep.subr.mxu0 0.0
        %554 = vmatpush1.msra.mxu0 0.0
        %555 = vmatprep.subr.mxu0 0.0
        %556 = vmatpush1.msra.mxu0 0.0
        %557 = vmatprep.subr.mxu0 0.0
        %558 = vmatpush1.msra.mxu0 0.0
        %559 = vmatprep.subr.mxu0 0.0
        %560 = vmatpush1.msra.mxu0 0.0
        %561 = vmatprep.subr.mxu0 0.0
        %562 = vmatpush1.msra.mxu0 0.0
        %563 = vmatprep.subr.mxu0 0.0
        %564 = vmatpush1.msra.mxu0 0.0
        %565 = vmatprep.subr.mxu0 0.0
        %566 = vmatpush1.msra.mxu0 0.0
        %567 = vmatprep.subr.mxu0 0.0
        %568 = vmatpush1.msra.mxu0 0.0
        %569 = vmatprep.subr.mxu0 0.0
        %570 = vmatpush1.msra.mxu0 0.0
        %571 = vmatprep.subr.mxu0 0.0
        %572 = vmatpush1.msra.mxu0 0.0
        %573 = vmatprep.subr.mxu0 0.0
        %574 = vmatpush1.msra.mxu0 0.0
        %575 = vmatprep.subr.mxu0 0.0
        %576 = vmatpush1.msra.mxu0 0.0
        %577 = vmatprep.subr.mxu0 0.0
        %578 = vmatpush1.msra.mxu0 0.0
        %579 = vmatprep.subr.mxu0 0.0
        %580 = vmatpush1.msra.mxu0 0.0
        %581 = vmatprep.subr.mxu0 0.0
        %582 = vmatpush1.msra.mxu0 0.0
        %583 = vmatprep.subr.mxu0 0.0
        %584 = vmatpush1.msra.mxu0 0.0
        %585 = vmatprep.subr.mxu0 0.0
        %586 = vmatpush1.msra.mxu0 0.0
        %587 = vmatprep.subr.mxu0 0.0
        %588 = vmatpush1.msra.mxu0 0.0
        %589 = vmatprep.subr.mxu0 0.0
        %590 = vmatpush1.msra.mxu0 0.0
        %591 = vmatprep.subr.mxu0 0.0
        %592 = vmatpush1.msra.mxu0 0.0
        %593 = vmatprep.subr.mxu0 0.0
        %594 = vmatpush1.msra.mxu0 0.0
        %595 = vmatprep.subr.mxu0 0.0
        %596 = vmatpush1.msra.mxu0 0.0
        %597 = vmatprep.subr.mxu0 0.0
        %598 = vmatpush1.msra.mxu0 0.0
        %599 = vmatprep.subr.mxu0 0.0
        %600 = vmatpush1.msra.mxu0 0.0
        %601 = vmatprep.subr.mxu0 0.0
        %602 = vmatpush1.msra.mxu0 0.0
        %603 = vmatprep.subr.mxu0 0.0
        %604 = vmatpush1.msra.mxu0 0.0
        %605 = vmatprep.subr.mxu0 0.0
        %606 = vmatpush1.msra.mxu0 0.0
        %607 = vmatprep.mubr.f32.mxu0 0.0
        %608 = vmatmul.mubr.f32.gmra.mrb[0].mxu0 %v538
        %v609 = vpop.f32.mrb[0].mxu0
        %v610 = vadd.f32 0.0, %v609
        %v611 = vpop.f32.mrb[0].mxu0
        %612 = vmatprep.mubr.f32.mxu0 0.0
        %613 = vmatmul.mubr.f32.gmra.mrb[0].mxu0 %v541
        %v614 = vpop.f32.mrb[0].mxu0
        %v615 = vadd.f32 0.0, %v614
        %v616 = vpop.f32.mrb[0].mxu0
        %617 = vdwg.mxu0
        %v618 = vld [vmem:[%s348] sm:$0xff]
        %v619 = vld [vmem:[%s348 + $0x8] sm:$0xff]
        %v620 = vld [vmem:[%s342] sm:$0xff]
        %v621 = vld [vmem:[%s342 + $0x8] sm:$0xff]
        %v622 = vsub.f32 %v620, %v610
        %v623 = vsub.f32 %v621, %v615
        %v624 = vmul.f32 %v618, %v622
        %v625 = vmul.f32 %v619, %v623
        %v626 = vadd.f32 %v610, %v624
        %v627 = vadd.f32 %v615, %v625
        %v629 = vsel %vm536, %v626, 0
        %v632 = vsel %vm536, %v627, 0
        %634 = vmatprep.subr.mxu0 0.0
        %635 = vmatpush1.msra.mxu0 %v362
        %636 = vmatprep.subr.mxu0 0.0
        %637 = vmatpush1.msra.mxu0 %v363
        %638 = vmatprep.subr.mxu0 0.0
        %639 = vmatpush1.msra.mxu0 %v364
        %640 = vmatprep.subr.mxu0 0.0
        %641 = vmatpush1.msra.mxu0 %v365
        %642 = vmatprep.subr.mxu0 0.0
        %643 = vmatpush1.msra.mxu0 0.0
        %644 = vmatprep.subr.mxu0 0.0
        %645 = vmatpush1.msra.mxu0 0.0
        %646 = vmatprep.subr.mxu0 0.0
        %647 = vmatpush1.msra.mxu0 0.0
        %648 = vmatprep.subr.mxu0 0.0
        %649 = vmatpush1.msra.mxu0 0.0
        %650 = vmatprep.subr.mxu0 0.0
        %651 = vmatpush1.msra.mxu0 0.0
        %652 = vmatprep.subr.mxu0 0.0
        %653 = vmatpush1.msra.mxu0 0.0
        %654 = vmatprep.subr.mxu0 0.0
        %655 = vmatpush1.msra.mxu0 0.0
        %656 = vmatprep.subr.mxu0 0.0
        %657 = vmatpush1.msra.mxu0 0.0
        %658 = vmatprep.subr.mxu0 0.0
        %659 = vmatpush1.msra.mxu0 0.0
        %660 = vmatprep.subr.mxu0 0.0
        %661 = vmatpush1.msra.mxu0 0.0
        %662 = vmatprep.subr.mxu0 0.0
        %663 = vmatpush1.msra.mxu0 0.0
        %664 = vmatprep.subr.mxu0 0.0
        %665 = vmatpush1.msra.mxu0 0.0
        %666 = vmatprep.subr.mxu0 0.0
        %667 = vmatpush1.msra.mxu0 0.0
        %668 = vmatprep.subr.mxu0 0.0
        %669 = vmatpush1.msra.mxu0 0.0
        %670 = vmatprep.subr.mxu0 0.0
        %671 = vmatpush1.msra.mxu0 0.0
        %672 = vmatprep.subr.mxu0 0.0
        %673 = vmatpush1.msra.mxu0 0.0
        %674 = vmatprep.subr.mxu0 0.0
        %675 = vmatpush1.msra.mxu0 0.0
        %676 = vmatprep.subr.mxu0 0.0
        %677 = vmatpush1.msra.mxu0 0.0
        %678 = vmatprep.subr.mxu0 0.0
        %679 = vmatpush1.msra.mxu0 0.0
        %680 = vmatprep.subr.mxu0 0.0
        %681 = vmatpush1.msra.mxu0 0.0
        %682 = vmatprep.subr.mxu0 0.0
        %683 = vmatpush1.msra.mxu0 0.0
        %684 = vmatprep.subr.mxu0 0.0
        %685 = vmatpush1.msra.mxu0 0.0
        %686 = vmatprep.subr.mxu0 0.0
        %687 = vmatpush1.msra.mxu0 0.0
        %688 = vmatprep.subr.mxu0 0.0
        %689 = vmatpush1.msra.mxu0 0.0
        %690 = vmatprep.subr.mxu0 0.0
        %691 = vmatpush1.msra.mxu0 0.0
        %692 = vmatprep.subr.mxu0 0.0
        %693 = vmatpush1.msra.mxu0 0.0
        %694 = vmatprep.subr.mxu0 0.0
        %695 = vmatpush1.msra.mxu0 0.0
        %696 = vmatprep.subr.mxu0 0.0
        %697 = vmatpush1.msra.mxu0 0.0
        %698 = vmatprep.mubr.f32.mxu0 0.0
        %699 = vmatmul.mubr.f32.gmra.mrb[0].mxu0 %v629
        %v700 = vpop.f32.mrb[0].mxu0
        %v701 = vadd.f32 0.0, %v700
        %v702 = vpop.f32.mrb[0].mxu0
        %703 = vmatprep.mubr.f32.mxu0 0.0
        %704 = vmatmul.mubr.f32.gmra.mrb[0].mxu0 %v632
        %v705 = vpop.f32.mrb[0].mxu0
        %v706 = vadd.f32 0.0, %v705
        %v707 = vpop.f32.mrb[0].mxu0
        %708 = vdwg.mxu0
        %709 = vxpose.xlu0.b32.start [1/16] %v701, 128
        %710 = vxpose.xlu0.b32.cont [2/16] %v706, 128
        %711 = vxpose.xlu0.b32.cont [3/16] 0.0, 128
        %712 = vxpose.xlu0.b32.cont [4/16] 0.0, 128
        %713 = vxpose.xlu0.b32.cont [5/16] 0.0, 128
        %714 = vxpose.xlu0.b32.cont [6/16] 0.0, 128
        %715 = vxpose.xlu0.b32.cont [7/16] 0.0, 128
        %716 = vxpose.xlu0.b32.cont [8/16] 0.0, 128
        %717 = vxpose.xlu0.b32.cont [9/16] 0.0, 128
        %718 = vxpose.xlu0.b32.cont [10/16] 0.0, 128
        %719 = vxpose.xlu0.b32.cont [11/16] 0.0, 128
        %720 = vxpose.xlu0.b32.cont [12/16] 0.0, 128
        %721 = vxpose.xlu0.b32.cont [13/16] 0.0, 128
        %722 = vxpose.xlu0.b32.cont [14/16] 0.0, 128
        %723 = vxpose.xlu0.b32.cont [15/16] 0.0, 128
        %724 = vxpose.xlu0.b32.end [16/16] 0.0, 128
        %v725 = vpop.trf.xlu0
        %v726 = vpop.trf.xlu0
        %v727 = vpop.trf.xlu0
        %v728 = vpop.trf.xlu0
        %v729 = vpop.trf.xlu0
        %v730 = vpop.trf.xlu0
        %v731 = vpop.trf.xlu0
        %v732 = vpop.trf.xlu0
        %v733 = vpop.trf.xlu0
        %v734 = vpop.trf.xlu0
        %v735 = vpop.trf.xlu0
        %v736 = vpop.trf.xlu0
        %v737 = vpop.trf.xlu0
        %v738 = vpop.trf.xlu0
        %v739 = vpop.trf.xlu0
        %v740 = vpop.trf.xlu0
        %743 = vrot.lane.b32.xlu0 %v701, 112
        %v744 = vpop.permute.xlu0 %743
        %745 = vrot.lane.b32.xlu0 %v706, 112
        %v746 = vpop.permute.xlu0 %745
        %749 = vxpose.xlu0.b32.start [1/16] %v744, 128
        %750 = vxpose.xlu0.b32.cont [2/16] %v746, 128
        %751 = vxpose.xlu0.b32.cont [3/16] 0.0, 128
        %752 = vxpose.xlu0.b32.cont [4/16] 0.0, 128
        %753 = vxpose.xlu0.b32.cont [5/16] 0.0, 128
        %754 = vxpose.xlu0.b32.cont [6/16] 0.0, 128
        %755 = vxpose.xlu0.b32.cont [7/16] 0.0, 128
        %756 = vxpose.xlu0.b32.cont [8/16] 0.0, 128
        %757 = vxpose.xlu0.b32.cont [9/16] 0.0, 128
        %758 = vxpose.xlu0.b32.cont [10/16] 0.0, 128
        %759 = vxpose.xlu0.b32.cont [11/16] 0.0, 128
        %760 = vxpose.xlu0.b32.cont [12/16] 0.0, 128
        %761 = vxpose.xlu0.b32.cont [13/16] 0.0, 128
        %762 = vxpose.xlu0.b32.cont [14/16] 0.0, 128
        %763 = vxpose.xlu0.b32.cont [15/16] 0.0, 128
        %764 = vxpose.xlu0.b32.end [16/16] 0.0, 128
        %v765 = vpop.trf.xlu0
        %v766 = vpop.trf.xlu0
        %v767 = vpop.trf.xlu0
        %v768 = vpop.trf.xlu0
        %v769 = vpop.trf.xlu0
        %v770 = vpop.trf.xlu0
        %v771 = vpop.trf.xlu0
        %v772 = vpop.trf.xlu0
        %v773 = vpop.trf.xlu0
        %v774 = vpop.trf.xlu0
        %v775 = vpop.trf.xlu0
        %v776 = vpop.trf.xlu0
        %v777 = vpop.trf.xlu0
        %v778 = vpop.trf.xlu0
        %v779 = vpop.trf.xlu0
        %v780 = vpop.trf.xlu0
        %783 = vrot.lane.b32.xlu0 %v765, 16
        %v784 = vpop.permute.xlu0 %783
        %785 = vrot.lane.b32.xlu0 %v766, 16
        %v786 = vpop.permute.xlu0 %785
        %v789 = vsel %vm372, %v725, %v784
        %v790 = vsel %vm372, %v726, %v786
        %v792 = vsel %vm536, %v789, 0
        %v795 = vsel %vm536, %v790, 0
        %797 = vmatprep.subr.mxu0 0.0
        %798 = vmatpush1.msra.mxu0 %v366
        %799 = vmatprep.subr.mxu0 0.0
        %800 = vmatpush1.msra.mxu0 %v367
        %801 = vmatprep.subr.mxu0 0.0
        %802 = vmatpush1.msra.mxu0 %v368
        %803 = vmatprep.subr.mxu0 0.0
        %804 = vmatpush1.msra.mxu0 %v369
        %805 = vmatprep.subr.mxu0 0.0
        %806 = vmatpush1.msra.mxu0 0.0
        %807 = vmatprep.subr.mxu0 0.0
        %808 = vmatpush1.msra.mxu0 0.0
        %809 = vmatprep.subr.mxu0 0.0
        %810 = vmatpush1.msra.mxu0 0.0
        %811 = vmatprep.subr.mxu0 0.0
        %812 = vmatpush1.msra.mxu0 0.0
        %813 = vmatprep.subr.mxu0 0.0
        %814 = vmatpush1.msra.mxu0 0.0
        %815 = vmatprep.subr.mxu0 0.0
        %816 = vmatpush1.msra.mxu0 0.0
        %817 = vmatprep.subr.mxu0 0.0
        %818 = vmatpush1.msra.mxu0 0.0
        %819 = vmatprep.subr.mxu0 0.0
        %820 = vmatpush1.msra.mxu0 0.0
        %821 = vmatprep.subr.mxu0 0.0
        %822 = vmatpush1.msra.mxu0 0.0
        %823 = vmatprep.subr.mxu0 0.0
        %824 = vmatpush1.msra.mxu0 0.0
        %825 = vmatprep.subr.mxu0 0.0
        %826 = vmatpush1.msra.mxu0 0.0
        %827 = vmatprep.subr.mxu0 0.0
        %828 = vmatpush1.msra.mxu0 0.0
        %829 = vmatprep.subr.mxu0 0.0
        %830 = vmatpush1.msra.mxu0 0.0
        %831 = vmatprep.subr.mxu0 0.0
        %832 = vmatpush1.msra.mxu0 0.0
        %833 = vmatprep.subr.mxu0 0.0
        %834 = vmatpush1.msra.mxu0 0.0
        %835 = vmatprep.subr.mxu0 0.0
        %836 = vmatpush1.msra.mxu0 0.0
        %837 = vmatprep.subr.mxu0 0.0
        %838 = vmatpush1.msra.mxu0 0.0
        %839 = vmatprep.subr.mxu0 0.0
        %840 = vmatpush1.msra.mxu0 0.0
        %841 = vmatprep.subr.mxu0 0.0
        %842 = vmatpush1.msra.mxu0 0.0
        %843 = vmatprep.subr.mxu0 0.0
        %844 = vmatpush1.msra.mxu0 0.0
        %845 = vmatprep.subr.mxu0 0.0
        %846 = vmatpush1.msra.mxu0 0.0
        %847 = vmatprep.subr.mxu0 0.0
        %848 = vmatpush1.msra.mxu0 0.0
        %849 = vmatprep.subr.mxu0 0.0
        %850 = vmatpush1.msra.mxu0 0.0
        %851 = vmatprep.subr.mxu0 0.0
        %852 = vmatpush1.msra.mxu0 0.0
        %853 = vmatprep.subr.mxu0 0.0
        %854 = vmatpush1.msra.mxu0 0.0
        %855 = vmatprep.subr.mxu0 0.0
        %856 = vmatpush1.msra.mxu0 0.0
        %857 = vmatprep.subr.mxu0 0.0
        %858 = vmatpush1.msra.mxu0 0.0
        %859 = vmatprep.subr.mxu0 0.0
        %860 = vmatpush1.msra.mxu0 0.0
        %861 = vmatprep.mubr.f32.mxu0 0.0
        %862 = vmatmul.mubr.f32.gmra.mrb[0].mxu0 %v792
        %v863 = vpop.f32.mrb[0].mxu0
        %v864 = vadd.f32 0.0, %v863
        %v865 = vpop.f32.mrb[0].mxu0
        %866 = vmatprep.mubr.f32.mxu0 0.0
        %867 = vmatmul.mubr.f32.gmra.mrb[0].mxu0 %v795
        %v868 = vpop.f32.mrb[0].mxu0
        %v869 = vadd.f32 0.0, %v868
        %v870 = vpop.f32.mrb[0].mxu0
        %871 = vdwg.mxu0
        %872 = vst.msk [vmem:[%s354] sm:$0xff] %vm372, %v864
        %873 = vst.msk [vmem:[%s354 + $0x8] sm:$0xff] %vm372, %v869
        %s874 = smul.u32 2, %s20
        %p875 = scmp.lt.s32.totalorder %s874, 3
        %s876 = scalar_select %p875, %s874, 3
        %s877 = smul.addr %s876, 8
        %s878 = scalar_lea.vmem %s7, %s877
        // Predicated region
        $region57: #{tpu_custom_call.1} parent=47 // pred_check
          %p879 = pneg %p200
        $region58: #{tpu_custom_call.1} parent=47 // pred_check_branch
          %881 = sbr.rel (%p879) target = $region60
        $region59: #{tpu_custom_call.1} parent=47 // pred_region
          %s882 = smul.u32 2, %s20
        $region60: #{tpu_custom_call.1} parent=47 // pred_fallthru
          _
      $region48: #{tpu_custom_call.1} parent=5 // pred_fallthru
        _
      %p883 = scmp.le.s32.totalorder 2, %s15
      // Predicated region
      $region61: #{tpu_custom_call.1} parent=5 // pred_check
        %p884 = pneg %p883
      $region62: #{tpu_custom_call.1} parent=5 // pred_check_branch
        %886 = sbr.rel (%p884) target = $region64
      $region63: #{tpu_custom_call.1} parent=5 // pred_region
        %s887 = ssub.s32 %s15, 2
        // Predicated region
        $region65: #{tpu_custom_call.1} parent=63 // pred_check
          %p888 = pneg %p206
        $region66: #{tpu_custom_call.1} parent=63 // pred_check_branch
          %890 = sbr.rel (%p888) target = $region68
        $region67: #{tpu_custom_call.1} parent=63 // pred_region
          %s891 = smul.u32 2, %s21
          %p892 = scmp.lt.s32.totalorder %s891, 3
          %s893 = scalar_select %p892, %s891, 3
          %s894 = smul.addr %s893, 8
          %s895 = scalar_lea.vmem %s7, %s894
        $region68: #{tpu_custom_call.1} parent=63 // pred_fallthru
          _
      $region64: #{tpu_custom_call.1} parent=5 // pred_fallthru
        _
    $region6: #{tpu_custom_call.1} parent=1 // loop_footer
      %s19 = sadd.s32 1, %s15
    $region7: #{tpu_custom_call.1} parent=1 // loop_footer_branch
      %14 = sbr.rel target = $region3
    $region8: #{tpu_custom_call.1} parent=1 // loop_exit
      _
    %896 = vsyncpa [#allocation3], 1
    %s897 = scalar_lea.sflag [#allocation3], 1
    %898 = vsyncpa %s897, 1
    %899 = vsyncpa [#allocation5], 1

</llo_original>
